<compile_context>
chip_gen: v5e
topology: v5e:2x2
jax: 0.10.0
libtpu: 0.0.40
codegen_flags: <defaults>
</compile_context>

<pallas_src>
import numpy as np

import jax
import jax.numpy as jnp
from jax import lax
from jax.experimental import pallas as pl
from jax.experimental.pallas import tpu as pltpu


def _basic_block_kernel(x_ref, m1_ref, s1_ref, b1_ref, m2_ref, s2_ref, b2_ref,
                        out_ref):
    """Fused conv-bn-relu-conv-bn-add-relu on one row-packed image.

    x_ref  : (1, K, L) f32   K = H//R lane-rows, L = R*W*C lanes (lane-dense)
    m*_ref : (3, L, L) bf16  banded conv weights, one per lane-row shift -1/0/+1
    s*,b*  : (1, L)    f32   folded BN scale / bias, tiled over (R, W)
    out_ref: (1, K, L) f32
    """
    x = x_ref[0]                                   # f32 resident -> skip path
    n_rows = x.shape[0]
    row = lax.broadcasted_iota(jnp.int32, x.shape, 0)
    top = row == 0
    bot = row == n_rows - 1

    def conv_bn(a_bf16, m_ref, s_ref, b_ref):
        # One MXU matmul per lane-row shift (K = L = 128, f32 accumulation).
        # SAME zero-padding along W is encoded inside the banded weight matrix;
        # zero-padding along H is the edge mask applied after an XLU sublane
        # roll of the two shifted partial results.
        y_up = jnp.dot(a_bf16, m_ref[0], preferred_element_type=jnp.float32)
        y_mid = jnp.dot(a_bf16, m_ref[1], preferred_element_type=jnp.float32)
        y_dn = jnp.dot(a_bf16, m_ref[2], preferred_element_type=jnp.float32)
        acc = y_mid
        # out[k] += y_up[k-1]  (zero at the top image edge)
        acc = acc + jnp.where(top, 0.0, pltpu.roll(y_up, shift=1, axis=0))
        # out[k] += y_dn[k+1]  (zero at the bottom image edge); roll by K-1 == -1
        acc = acc + jnp.where(bot, 0.0,
                              pltpu.roll(y_dn, shift=n_rows - 1, axis=0))
        return acc * s_ref[0] + b_ref[0]

    mid = jnp.maximum(conv_bn(x.astype(jnp.bfloat16), m1_ref, s1_ref, b1_ref),
                      0.0)
    out = conv_bn(mid.astype(jnp.bfloat16), m2_ref, s2_ref, b2_ref)
    out_ref[0] = jnp.maximum(out + x, 0.0).astype(out_ref.dtype)


def _packed_conv_weights(w_hwio, width, rows_per_band, dtype=jnp.bfloat16):
    """Lower a 3x3 SAME conv to three banded matmuls on a row-packed layout.

    Activations are viewed as (H // R, R*W*C): lane-row k and lane index
    j = rho*W*C + w*C + c correspond to pixel (r = R*k + rho, w, c).
    Returns m with m.shape == (3, R*W*Cin, R*W*Cout) such that
        out_packed[k] = sum_{s in {-1,0,1}} x_packed[k + s] @ m[s + 1]
    (lane-rows outside [0, H//R) treated as zero) equals the SAME conv.
    """
    kh, kw, cin, cout = w_hwio.shape
    assert kh == 3 and kw == 3
    R, W = rows_per_band, width
    w_np = np.asarray(jax.device_get(w_hwio), dtype=np.float32)
    m = np.zeros((3, R * W * cin, R * W * cout), dtype=np.float32)
    for s in (-1, 0, 1):
        for rho_out in range(R):              # packed output image row
            for rho_in in range(R):           # packed input image row
                dr = R * s + rho_in - rho_out  # vertical conv tap
                if dr < -1 or dr > 1:
                    continue
                for w in range(W):            # output image column
                    for dc in (-1, 0, 1):     # horizontal conv tap
                        wp = w + dc           # input column; out-of-range taps
                        if wp < 0 or wp >= W:  # stay zero -> SAME padding in W
                            continue
                        r0 = (rho_in * W + wp) * cin
                        c0 = (rho_out * W + w) * cout
                        m[s + 1, r0:r0 + cin, c0:c0 + cout] = w_np[dr + 1, dc + 1]
    return jnp.asarray(m, dtype)


def basic_block_pallas(x_nhwc, w1, s1, b1, w2, s2, b2):
    """x_nhwc: (B,H,W,C) f32.  w*: (3,3,C,C) HWIO.  s*/b*: per-channel folded BN."""
    B, H, W, C = x_nhwc.shape
    wc = W * C
    # Pack R image rows per lane-row so the lane dim is a dense multiple of 128.
    R = 128 // wc if (wc < 128 and 128 % wc == 0 and H % (128 // wc) == 0) else 1
    K, L = H // R, R * wc

    m1 = _packed_conv_weights(w1, W, R)            # bf16 MXU weights
    m2 = _packed_conv_weights(w2, W, R)

    def tile_chan(v):
        return jnp.tile(jnp.reshape(v, (-1,)).astype(jnp.float32),
                        R * W).reshape(1, L)

    s1p, b1p, s2p, b2p = (tile_chan(v) for v in (s1, b1, s2, b2))

    x_packed = x_nhwc.reshape(B, K, L)             # free minor-dim merge

    # Per-step VMEM estimate (double-buffered blocks): must fit v7x's 64 MiB
    # core VMEM; v5e/v6e have 128 MiB, so the same budget is safe everywhere.
    vmem_est = (2 * 2 * K * L * 4            # x block + out block, 2 buffers
                + 2 * 2 * 3 * L * L * 2      # two banded weight sets, 2 buffers
                + 4 * 2 * L * 4)             # scale/bias
    vmem_limit = 32 * 1024 * 1024
    assert vmem_est < vmem_limit, (vmem_est, vmem_limit)
    # TODO(synk): if H*W*C grows past this budget, fall back to a row-tiled
    # grid with 1-row halo blocks instead of whole-image blocks.

    out_packed = pl.pallas_call(
        _basic_block_kernel,
        out_shape=jax.ShapeDtypeStruct((B, K, L), jnp.float32),
        grid_spec=pltpu.PrefetchScalarGridSpec(
            num_scalar_prefetch=0,
            grid=(B,),                       # one image per step; B steps are
            in_specs=[                       # "parallel" -> both v7x TCs busy
                pl.BlockSpec((1, K, L), lambda b: (b, 0, 0)),
                pl.BlockSpec((3, L, L), lambda b: (0, 0, 0)),
                pl.BlockSpec((1, L), lambda b: (0, 0)),
                pl.BlockSpec((1, L), lambda b: (0, 0)),
                pl.BlockSpec((3, L, L), lambda b: (0, 0, 0)),
                pl.BlockSpec((1, L), lambda b: (0, 0)),
                pl.BlockSpec((1, L), lambda b: (0, 0)),
            ],
            out_specs=pl.BlockSpec((1, K, L), lambda b: (b, 0, 0)),
        ),
        compiler_params=pltpu.CompilerParams(
            dimension_semantics=("parallel",),
            vmem_limit_bytes=vmem_limit,
        ),
    )(x_packed, m1, s1p, b1p, m2, s2p, b2p)

    return out_packed.reshape(B, H, W, C)


def _fold_bn(gamma, beta, mean, var, eps=1e-5):
    scale = gamma / jnp.sqrt(var + eps)
    return scale, beta - mean * scale


def _reference_basic_block(x_nhwc, w1, s1, b1, w2, s2, b2):
    dn = ("NHWC", "HWIO", "NHWC")
    r = lambda v: v.reshape(1, 1, 1, -1)
    out = lax.conv_general_dilated(x_nhwc, w1, (1, 1), "SAME",
                                   dimension_numbers=dn)
    out = jnp.maximum(out * r(s1) + r(b1), 0.0)
    out = lax.conv_general_dilated(out, w2, (1, 1), "SAME",
                                   dimension_numbers=dn)
    out = out * r(s2) + r(b2)
    return jnp.maximum(out + x_nhwc, 0.0)


if __name__ == "__main__":
    B, C, H, W = 2, 4, 16, 16       # inplanes = planes = 4, stride = 1

    key = jax.random.PRNGKey(0)
    kx, kw1, kw2, kg1, kb1, km1, kg2, kb2, km2 = jax.random.split(key, 9)

    # Input / weights in PyTorch convention (NCHW / OIHW), transposed at the
    # boundary to NHWC / HWIO for the kernel.
    x_nchw = jax.random.normal(kx, (B, C, H, W), dtype=jnp.float32)
    x_nhwc = jnp.transpose(x_nchw, (0, 2, 3, 1))
    w1_oihw = 0.1 * jax.random.normal(kw1, (C, C, 3, 3), dtype=jnp.float32)
    w2_oihw = 0.1 * jax.random.normal(kw2, (C, C, 3, 3), dtype=jnp.float32)
    w1 = jnp.transpose(w1_oihw, (2, 3, 1, 0))
    w2 = jnp.transpose(w2_oihw, (2, 3, 1, 0))

    # BatchNorm params (eval-mode fold): gamma, beta, running_mean, running_var.
    g1 = 1.0 + 0.1 * jax.random.normal(kg1, (C,), dtype=jnp.float32)
    be1 = 0.1 * jax.random.normal(kb1, (C,), dtype=jnp.float32)
    mu1 = 0.1 * jax.random.normal(km1, (C,), dtype=jnp.float32)
    v1 = jnp.ones((C,), dtype=jnp.float32)
    g2 = 1.0 + 0.1 * jax.random.normal(kg2, (C,), dtype=jnp.float32)
    be2 = 0.1 * jax.random.normal(kb2, (C,), dtype=jnp.float32)
    mu2 = 0.1 * jax.random.normal(km2, (C,), dtype=jnp.float32)
    v2 = jnp.ones((C,), dtype=jnp.float32)

    s1, b1 = _fold_bn(g1, be1, mu1, v1)
    s2, b2 = _fold_bn(g2, be2, mu2, v2)

    out_nhwc = jax.block_until_ready(
        basic_block_pallas(x_nhwc, w1, s1, b1, w2, s2, b2))
    out_nchw = jnp.transpose(out_nhwc, (0, 3, 1, 2))   # back to PyTorch layout

    # Reference in f32; the kernel feeds bf16 operands to the MXU (f32 accum),
    # hence the relaxed tolerance.
    ref = _reference_basic_block(x_nhwc, w1, s1, b1, w2, s2, b2)
    np.testing.assert_allclose(np.asarray(out_nhwc), np.asarray(ref),
                               rtol=2e-2, atol=2e-2)
    assert out_nchw.shape == (B, C, H, W)
    print("KERNEL_OK")
</pallas_src>

<mosaic_0001>
module attributes {stable_mosaic.version = 11 : i64} {
  func.func @_basic_block_kernel(%arg0: i32, %arg1: memref<1x8x128xf32, #tpu.memory_space<vmem>>, %arg2: memref<3x128x128xbf16, #tpu.memory_space<vmem>>, %arg3: memref<1x128xf32, #tpu.memory_space<vmem>>, %arg4: memref<1x128xf32, #tpu.memory_space<vmem>>, %arg5: memref<3x128x128xbf16, #tpu.memory_space<vmem>>, %arg6: memref<1x128xf32, #tpu.memory_space<vmem>>, %arg7: memref<1x128xf32, #tpu.memory_space<vmem>>, %arg8: memref<1x8x128xf32, #tpu.memory_space<vmem>>) attributes {dimension_semantics = [#tpu.dimension_semantics<parallel>], iteration_bounds = array<i64: 2>, scalar_prefetch = 0 : i64, scratch_operands = 0 : i64, tpu.core_type = #tpu.core_type<tc>, window_params = [{transform_indices = @transform_0, window_bounds = array<i64: 1, 8, 128>}, {pipeline_mode = #tpu.pipeline_mode<synchronous>, transform_indices = @transform_1, window_bounds = array<i64: 3, 128, 128>}, {pipeline_mode = #tpu.pipeline_mode<synchronous>, transform_indices = @transform_2, window_bounds = array<i64: 1, 128>}, {pipeline_mode = #tpu.pipeline_mode<synchronous>, transform_indices = @transform_3, window_bounds = array<i64: 1, 128>}, {pipeline_mode = #tpu.pipeline_mode<synchronous>, transform_indices = @transform_4, window_bounds = array<i64: 3, 128, 128>}, {pipeline_mode = #tpu.pipeline_mode<synchronous>, transform_indices = @transform_5, window_bounds = array<i64: 1, 128>}, {pipeline_mode = #tpu.pipeline_mode<synchronous>, transform_indices = @transform_6, window_bounds = array<i64: 1, 128>}, {transform_indices = @transform_7, window_bounds = array<i64: 1, 8, 128>}]} {
    %c0 = arith.constant 0 : index
    %c0_0 = arith.constant 0 : index
    %c0_1 = arith.constant 0 : index
    %0 = vector.load %arg1[%c0, %c0_0, %c0_1] : memref<1x8x128xf32, #tpu.memory_space<vmem>>, vector<1x8x128xf32>
    %1 = vector.shape_cast %0 : vector<1x8x128xf32> to vector<8x128xf32>
    %2 = tpu.iota {dimensions = array<i32: 0>} : vector<8x128xi32>
    %c0_i32 = arith.constant 0 : i32
    %3 = vector.broadcast %c0_i32 : i32 to vector<8x128xi32>
    %4 = arith.cmpi eq, %2, %3 : vector<8x128xi32>
    %c7_i32 = arith.constant 7 : i32
    %5 = vector.broadcast %c7_i32 : i32 to vector<8x128xi32>
    %6 = arith.cmpi eq, %2, %5 : vector<8x128xi32>
    %7 = arith.truncf %1 : vector<8x128xf32> to vector<8x128xbf16>
    %c0_2 = arith.constant 0 : index
    %c0_3 = arith.constant 0 : index
    %c0_4 = arith.constant 0 : index
    %8 = vector.load %arg2[%c0_2, %c0_3, %c0_4] : memref<3x128x128xbf16, #tpu.memory_space<vmem>>, vector<1x128x128xbf16>
    %9 = vector.shape_cast %8 : vector<1x128x128xbf16> to vector<128x128xbf16>
    %cst = arith.constant dense<0.000000e+00> : vector<8x128xf32>
    %10 = tpu.matmul %7, %9, %cst {dimension_numbers = #tpu.dot_dimension_numbers<[1], [0], [0], [1], [0, 0, 1, 1], [], []>} : vector<8x128xbf16>, vector<128x128xbf16>, vector<8x128xf32> -> vector<8x128xf32>
    %c1 = arith.constant 1 : index
    %c0_5 = arith.constant 0 : index
    %c0_6 = arith.constant 0 : index
    %11 = vector.load %arg2[%c1, %c0_5, %c0_6] : memref<3x128x128xbf16, #tpu.memory_space<vmem>>, vector<1x128x128xbf16>
    %12 = vector.shape_cast %11 : vector<1x128x128xbf16> to vector<128x128xbf16>
    %cst_7 = arith.constant dense<0.000000e+00> : vector<8x128xf32>
    %13 = tpu.matmul %7, %12, %cst_7 {dimension_numbers = #tpu.dot_dimension_numbers<[1], [0], [0], [1], [0, 0, 1, 1], [], []>} : vector<8x128xbf16>, vector<128x128xbf16>, vector<8x128xf32> -> vector<8x128xf32>
    %c2 = arith.constant 2 : index
    %c0_8 = arith.constant 0 : index
    %c0_9 = arith.constant 0 : index
    %14 = vector.load %arg2[%c2, %c0_8, %c0_9] : memref<3x128x128xbf16, #tpu.memory_space<vmem>>, vector<1x128x128xbf16>
    %15 = vector.shape_cast %14 : vector<1x128x128xbf16> to vector<128x128xbf16>
    %cst_10 = arith.constant dense<0.000000e+00> : vector<8x128xf32>
    %16 = tpu.matmul %7, %15, %cst_10 {dimension_numbers = #tpu.dot_dimension_numbers<[1], [0], [0], [1], [0, 0, 1, 1], [], []>} : vector<8x128xbf16>, vector<128x128xbf16>, vector<8x128xf32> -> vector<8x128xf32>
    %c1_i32 = arith.constant 1 : i32
    %17 = tpu.dynamic_rotate %10 by %c1_i32 dim 0 : vector<8x128xf32>, i32 -> vector<8x128xf32>
    %cst_11 = arith.constant 0.000000e+00 : f32
    %18 = vector.broadcast %cst_11 : f32 to vector<8x128xf32>
    %19 = arith.select %4, %18, %17 : vector<8x128xi1>, vector<8x128xf32>
    %20 = arith.addf %13, %19 : vector<8x128xf32>
    %c7_i32_12 = arith.constant 7 : i32
    %21 = tpu.dynamic_rotate %16 by %c7_i32_12 dim 0 : vector<8x128xf32>, i32 -> vector<8x128xf32>
    %cst_13 = arith.constant 0.000000e+00 : f32
    %22 = vector.broadcast %cst_13 : f32 to vector<8x128xf32>
    %23 = arith.select %6, %22, %21 : vector<8x128xi1>, vector<8x128xf32>
    %24 = arith.addf %20, %23 : vector<8x128xf32>
    %c0_14 = arith.constant 0 : index
    %c0_15 = arith.constant 0 : index
    %25 = vector.load %arg3[%c0_14, %c0_15] : memref<1x128xf32, #tpu.memory_space<vmem>>, vector<1x128xf32>
    %26 = vector.shape_cast %25 : vector<1x128xf32> to vector<128xf32>
    %27 = vector.shape_cast %26 : vector<128xf32> to vector<1x128xf32>
    %28 = vector.broadcast %27 : vector<1x128xf32> to vector<8x128xf32>
    %29 = arith.mulf %24, %28 : vector<8x128xf32>
    %c0_16 = arith.constant 0 : index
    %c0_17 = arith.constant 0 : index
    %30 = vector.load %arg4[%c0_16, %c0_17] : memref<1x128xf32, #tpu.memory_space<vmem>>, vector<1x128xf32>
    %31 = vector.shape_cast %30 : vector<1x128xf32> to vector<128xf32>
    %32 = vector.shape_cast %31 : vector<128xf32> to vector<1x128xf32>
    %33 = vector.broadcast %32 : vector<1x128xf32> to vector<8x128xf32>
    %34 = arith.addf %29, %33 : vector<8x128xf32>
    %cst_18 = arith.constant 0.000000e+00 : f32
    %35 = vector.broadcast %cst_18 : f32 to vector<8x128xf32>
    %36 = arith.maximumf %34, %35 : vector<8x128xf32>
    %37 = arith.truncf %36 : vector<8x128xf32> to vector<8x128xbf16>
    %c0_19 = arith.constant 0 : index
    %c0_20 = arith.constant 0 : index
    %c0_21 = arith.constant 0 : index
    %38 = vector.load %arg5[%c0_19, %c0_20, %c0_21] : memref<3x128x128xbf16, #tpu.memory_space<vmem>>, vector<1x128x128xbf16>
    %39 = vector.shape_cast %38 : vector<1x128x128xbf16> to vector<128x128xbf16>
    %cst_22 = arith.constant dense<0.000000e+00> : vector<8x128xf32>
    %40 = tpu.matmul %37, %39, %cst_22 {dimension_numbers = #tpu.dot_dimension_numbers<[1], [0], [0], [1], [0, 0, 1, 1], [], []>} : vector<8x128xbf16>, vector<128x128xbf16>, vector<8x128xf32> -> vector<8x128xf32>
    %c1_23 = arith.constant 1 : index
    %c0_24 = arith.constant 0 : index
    %c0_25 = arith.constant 0 : index
    %41 = vector.load %arg5[%c1_23, %c0_24, %c0_25] : memref<3x128x128xbf16, #tpu.memory_space<vmem>>, vector<1x128x128xbf16>
    %42 = vector.shape_cast %41 : vector<1x128x128xbf16> to vector<128x128xbf16>
    %cst_26 = arith.constant dense<0.000000e+00> : vector<8x128xf32>
    %43 = tpu.matmul %37, %42, %cst_26 {dimension_numbers = #tpu.dot_dimension_numbers<[1], [0], [0], [1], [0, 0, 1, 1], [], []>} : vector<8x128xbf16>, vector<128x128xbf16>, vector<8x128xf32> -> vector<8x128xf32>
    %c2_27 = arith.constant 2 : index
    %c0_28 = arith.constant 0 : index
    %c0_29 = arith.constant 0 : index
    %44 = vector.load %arg5[%c2_27, %c0_28, %c0_29] : memref<3x128x128xbf16, #tpu.memory_space<vmem>>, vector<1x128x128xbf16>
    %45 = vector.shape_cast %44 : vector<1x128x128xbf16> to vector<128x128xbf16>
    %cst_30 = arith.constant dense<0.000000e+00> : vector<8x128xf32>
    %46 = tpu.matmul %37, %45, %cst_30 {dimension_numbers = #tpu.dot_dimension_numbers<[1], [0], [0], [1], [0, 0, 1, 1], [], []>} : vector<8x128xbf16>, vector<128x128xbf16>, vector<8x128xf32> -> vector<8x128xf32>
    %c1_i32_31 = arith.constant 1 : i32
    %47 = tpu.dynamic_rotate %40 by %c1_i32_31 dim 0 : vector<8x128xf32>, i32 -> vector<8x128xf32>
    %cst_32 = arith.constant 0.000000e+00 : f32
    %48 = vector.broadcast %cst_32 : f32 to vector<8x128xf32>
    %49 = arith.select %4, %48, %47 : vector<8x128xi1>, vector<8x128xf32>
    %50 = arith.addf %43, %49 : vector<8x128xf32>
    %c7_i32_33 = arith.constant 7 : i32
    %51 = tpu.dynamic_rotate %46 by %c7_i32_33 dim 0 : vector<8x128xf32>, i32 -> vector<8x128xf32>
    %cst_34 = arith.constant 0.000000e+00 : f32
    %52 = vector.broadcast %cst_34 : f32 to vector<8x128xf32>
    %53 = arith.select %6, %52, %51 : vector<8x128xi1>, vector<8x128xf32>
    %54 = arith.addf %50, %53 : vector<8x128xf32>
    %c0_35 = arith.constant 0 : index
    %c0_36 = arith.constant 0 : index
    %55 = vector.load %arg6[%c0_35, %c0_36] : memref<1x128xf32, #tpu.memory_space<vmem>>, vector<1x128xf32>
    %56 = vector.shape_cast %55 : vector<1x128xf32> to vector<128xf32>
    %57 = vector.shape_cast %56 : vector<128xf32> to vector<1x128xf32>
    %58 = vector.broadcast %57 : vector<1x128xf32> to vector<8x128xf32>
    %59 = arith.mulf %54, %58 : vector<8x128xf32>
    %c0_37 = arith.constant 0 : index
    %c0_38 = arith.constant 0 : index
    %60 = vector.load %arg7[%c0_37, %c0_38] : memref<1x128xf32, #tpu.memory_space<vmem>>, vector<1x128xf32>
    %61 = vector.shape_cast %60 : vector<1x128xf32> to vector<128xf32>
    %62 = vector.shape_cast %61 : vector<128xf32> to vector<1x128xf32>
    %63 = vector.broadcast %62 : vector<1x128xf32> to vector<8x128xf32>
    %64 = arith.addf %59, %63 : vector<8x128xf32>
    %65 = arith.addf %64, %1 : vector<8x128xf32>
    %cst_39 = arith.constant 0.000000e+00 : f32
    %66 = vector.broadcast %cst_39 : f32 to vector<8x128xf32>
    %67 = arith.maximumf %65, %66 : vector<8x128xf32>
    %c0_40 = arith.constant 0 : index
    %c0_41 = arith.constant 0 : index
    %c0_42 = arith.constant 0 : index
    %68 = vector.load %arg8[%c0_40, %c0_41, %c0_42] : memref<1x8x128xf32, #tpu.memory_space<vmem>>, vector<1x8x128xf32>
    %69 = vector.shape_cast %68 : vector<1x8x128xf32> to vector<8x128xf32>
    %70 = vector.shape_cast %67 : vector<8x128xf32> to vector<1x8x128xf32>
    tpu.vector_store %arg8[%c0_40, %c0_41, %c0_42], %70 {strides = array<i32>} : memref<1x8x128xf32, #tpu.memory_space<vmem>>, vector<1x8x128xf32>,
    return
  }
  func.func @transform_0(%arg0: i32) -> (i32, i32, i32) {
    %c0_i32 = arith.constant 0 : i32
    %c0_i32_0 = arith.constant 0 : i32
    %c0_i32_1 = arith.constant 0 : i32
    return %arg0, %c0_i32, %c0_i32_0 : i32, i32, i32
  }
  func.func @transform_1(%arg0: i32) -> (i32, i32, i32) {
    %c0_i32 = arith.constant 0 : i32
    %c0_i32_0 = arith.constant 0 : i32
    %c0_i32_1 = arith.constant 0 : i32
    %c0_i32_2 = arith.constant 0 : i32
    return %c0_i32, %c0_i32_0, %c0_i32_1 : i32, i32, i32
  }
  func.func @transform_2(%arg0: i32) -> (i32, i32) {
    %c0_i32 = arith.constant 0 : i32
    %c0_i32_0 = arith.constant 0 : i32
    %c0_i32_1 = arith.constant 0 : i32
    return %c0_i32, %c0_i32_0 : i32, i32
  }
  func.func @transform_3(%arg0: i32) -> (i32, i32) {
    %c0_i32 = arith.constant 0 : i32
    %c0_i32_0 = arith.constant 0 : i32
    %c0_i32_1 = arith.constant 0 : i32
    return %c0_i32, %c0_i32_0 : i32, i32
  }
  func.func @transform_4(%arg0: i32) -> (i32, i32, i32) {
    %c0_i32 = arith.constant 0 : i32
    %c0_i32_0 = arith.constant 0 : i32
    %c0_i32_1 = arith.constant 0 : i32
    %c0_i32_2 = arith.constant 0 : i32
    return %c0_i32, %c0_i32_0, %c0_i32_1 : i32, i32, i32
  }
  func.func @transform_5(%arg0: i32) -> (i32, i32) {
    %c0_i32 = arith.constant 0 : i32
    %c0_i32_0 = arith.constant 0 : i32
    %c0_i32_1 = arith.constant 0 : i32
    return %c0_i32, %c0_i32_0 : i32, i32
  }
  func.func @transform_6(%arg0: i32) -> (i32, i32) {
    %c0_i32 = arith.constant 0 : i32
    %c0_i32_0 = arith.constant 0 : i32
    %c0_i32_1 = arith.constant 0 : i32
    return %c0_i32, %c0_i32_0 : i32, i32
  }
  func.func @transform_7(%arg0: i32) -> (i32, i32, i32) {
    %c0_i32 = arith.constant 0 : i32
    %c0_i32_0 = arith.constant 0 : i32
    %c0_i32_1 = arith.constant 0 : i32
    return %arg0, %c0_i32, %c0_i32_0 : i32, i32, i32
  }
}

</mosaic_0001>

<llo_original>
// kernel: tpu_custom_call.1
$region0: #{tpu_custom_call.1}
  #allocation0 [shape = 'u32[]', space=smem, size = 0x4, offset = 0x4, fixed_abs, tag = 'smem constant byte address 0x4 - core index']
  #allocation1 [shape = 'u32[72,128]{1,0:T(1,128)}', space=vmem, size = 0x9000, scoped, tag = 'internal scratch']
  %s0 = inlined_call_operand.hbm [shape: f32[2,8,128], index: 0, kind: input, shape index: {}]
  %s1 = inlined_call_operand.hbm [shape: bf16[3,128,128], index: 1, kind: input, shape index: {}]
  %s2 = inlined_call_operand.vmem [shape: f32[1,128], index: 2, kind: input, shape index: {}]
  %s3 = inlined_call_operand.vmem [shape: f32[1,128], index: 3, kind: input, shape index: {}]
  %s4 = inlined_call_operand.hbm [shape: bf16[3,128,128], index: 4, kind: input, shape index: {}]
  %s5 = inlined_call_operand.vmem [shape: f32[1,128], index: 5, kind: input, shape index: {}]
  %s6 = inlined_call_operand.vmem [shape: f32[1,128], index: 6, kind: input, shape index: {}]
  %s7 = inlined_call_operand.hbm [shape: f32[2,8,128], index: 7, kind: output, shape index: {}]
  %s8 = sld [smem:[#allocation0]]
  $region73: #{tpu_custom_call.1} parent=0
    _
  %s10 = ssub.s32 1, %s8
  %s11 = scalar_select 0, %s10, %s8
  $region1: #{tpu_custom_call.1} parent=0
    #allocation2 [shape = 'u8[8192]{0}', space=vmem, size = 0x2000, scoped, tag = 'input window, operand 0']
    #allocation3 [shape = 's32[2]{0}', space=sflag, size = 0x8, scoped, tag = 'scoped memory for tpu_custom_call.1']
    #allocation4 [shape = 's32[2]{0}', space=sflag, size = 0x8, scoped, tag = 'scoped memory for tpu_custom_call.1']
    #allocation5 [shape = 'u8[98304]{0}', space=vmem, size = 0x18000, scoped, tag = 'input window, operand 1, single buffered']
    #allocation6 [shape = 's32[1]{0}', space=sflag, size = 0x4, scoped, tag = 'scoped memory for tpu_custom_call.1']
    #allocation7 [shape = 'u8[98304]{0}', space=vmem, size = 0x18000, scoped, tag = 'input window, operand 4, single buffered']
    #allocation8 [shape = 'u8[8192]{0}', space=vmem, size = 0x2000, scoped, tag = 'output window, operand 0']
    %12 = vsyncpa [#allocation3], 0
    %s13 = scalar_lea.sflag [#allocation3], 1
    %14 = vsyncpa %s13, 0
    %15 = vsyncpa [#allocation6], 0
    %16 = vsyncpa [#allocation4], 0
    %s17 = scalar_lea.sflag [#allocation4], 1
    %18 = vsyncpa %s17, 0
    loop: start=0, step=1, limit=4
    $region2: #{tpu_custom_call.1} parent=1 // loop_pre_header
      _
    $region3: #{tpu_custom_call.1} parent=1 // loop_header
      %s20 = sphi 0, %s24
      %p21 = scmp.ge.s32.totalorder %s20, 4
      %s30 = sphi 0, %s32
      %s33 = sphi 0, %s30
      %s34 = sphi 0, %s33
      %s50 = sphi 0, %s34
      %s54 = sphi 0, %s54
      %s56 = sphi 0, %s54
      %s57 = sphi 0, %s56
      %s71 = sphi 0, %s57
      %s75 = sphi 0, %s75
      %s77 = sphi 0, %s75
      %s78 = sphi 0, %s77
      %s92 = sphi 0, %s78
      %s96 = sphi 0, %s96
      %s98 = sphi 0, %s96
      %s99 = sphi 0, %s98
      %s113 = sphi 0, %s99
      %s117 = sphi 0, %s117
      %s119 = sphi 0, %s117
      %s120 = sphi 0, %s119
      %s134 = sphi 0, %s120
      %s138 = sphi 0, %s138
      %s140 = sphi 0, %s138
      %s141 = sphi 0, %s140
      %s155 = sphi 0, %s141
      %s159 = sphi 0, %s159
      %s161 = sphi 0, %s159
      %s162 = sphi 0, %s161
      %s176 = sphi 0, %s162
      %s182 = sphi 0, %s184
      %s185 = sphi 0, %s182
      %s186 = sphi 0, %s185
      %s202 = sphi 0, %s186
    $region4: #{tpu_custom_call.1} parent=1 // loop_header_branch
      %23 = sbr.rel (%p21) target = $region8
    $region5: #{tpu_custom_call.1} parent=1 // loop_body
      %s25 = ssub.s32 %s20, 1
      %s26 = ssub.s32 %s20, 2
      %s27 = sadd.s32 %s20, 1
      %s28 = ssub.s32 %s20, %s27
      %p29 = scmp.eq.s32.totalorder %s28, 0
      %s31 = sadd.s32 %s30, 1
      %s32 = scalar_select %p29, %s30, %s31
      %p35 = pneg %p29
      %p36 = scmp.eq.s32.totalorder %s20, 1
      %p37 = por %p35, %p36
      %p38 = scmp.ne.s32.totalorder %s30, %s33
      %p39 = scmp.eq.s32.totalorder %s20, 0
      %p40 = por %p38, %p39
      %p41 = scmp.ne.s32.totalorder %s30, %s33
      %p42 = scmp.eq.s32.totalorder %s25, 1
      %p43 = por %p41, %p42
      %p44 = scmp.ne.s32.totalorder %s33, %s34
      %p45 = scmp.eq.s32.totalorder %s25, 0
      %p46 = por %p44, %p45
      %p47 = scmp.ne.s32.totalorder %s33, %s34
      %p48 = scmp.eq.s32.totalorder %s26, 1
      %p49 = por %p47, %p48
      %p51 = scmp.ne.s32.totalorder %s34, %s50
      %p52 = scmp.eq.s32.totalorder %s26, 0
      %p53 = por %p51, %p52
      %s55 = sadd.s32 %s54, 1
      %p58 = scmp.eq.s32.totalorder %s20, 1
      %p59 = scmp.ne.s32.totalorder %s54, %s56
      %p60 = scmp.eq.s32.totalorder %s20, 0
      %p61 = por %p59, %p60
      %p62 = scmp.ne.s32.totalorder %s54, %s56
      %p63 = scmp.eq.s32.totalorder %s25, 1
      %p64 = por %p62, %p63
      %p65 = scmp.ne.s32.totalorder %s56, %s57
      %p66 = scmp.eq.s32.totalorder %s25, 0
      %p67 = por %p65, %p66
      %p68 = scmp.ne.s32.totalorder %s56, %s57
      %p69 = scmp.eq.s32.totalorder %s26, 1
      %p70 = por %p68, %p69
      %p72 = scmp.ne.s32.totalorder %s57, %s71
      %p73 = scmp.eq.s32.totalorder %s26, 0
      %p74 = por %p72, %p73
      %s76 = sadd.s32 %s75, 1
      %p79 = scmp.eq.s32.totalorder %s20, 1
      %p80 = scmp.ne.s32.totalorder %s75, %s77
      %p81 = scmp.eq.s32.totalorder %s20, 0
      %p82 = por %p80, %p81
      %p83 = scmp.ne.s32.totalorder %s75, %s77
      %p84 = scmp.eq.s32.totalorder %s25, 1
      %p85 = por %p83, %p84
      %p86 = scmp.ne.s32.totalorder %s77, %s78
      %p87 = scmp.eq.s32.totalorder %s25, 0
      %p88 = por %p86, %p87
      %p89 = scmp.ne.s32.totalorder %s77, %s78
      %p90 = scmp.eq.s32.totalorder %s26, 1
      %p91 = por %p89, %p90
      %p93 = scmp.ne.s32.totalorder %s78, %s92
      %p94 = scmp.eq.s32.totalorder %s26, 0
      %p95 = por %p93, %p94
      %s97 = sadd.s32 %s96, 1
      %p100 = scmp.eq.s32.totalorder %s20, 1
      %p101 = scmp.ne.s32.totalorder %s96, %s98
      %p102 = scmp.eq.s32.totalorder %s20, 0
      %p103 = por %p101, %p102
      %p104 = scmp.ne.s32.totalorder %s96, %s98
      %p105 = scmp.eq.s32.totalorder %s25, 1
      %p106 = por %p104, %p105
      %p107 = scmp.ne.s32.totalorder %s98, %s99
      %p108 = scmp.eq.s32.totalorder %s25, 0
      %p109 = por %p107, %p108
      %p110 = scmp.ne.s32.totalorder %s98, %s99
      %p111 = scmp.eq.s32.totalorder %s26, 1
      %p112 = por %p110, %p111
      %p114 = scmp.ne.s32.totalorder %s99, %s113
      %p115 = scmp.eq.s32.totalorder %s26, 0
      %p116 = por %p114, %p115
      %s118 = sadd.s32 %s117, 1
      %p121 = scmp.eq.s32.totalorder %s20, 1
      %p122 = scmp.ne.s32.totalorder %s117, %s119
      %p123 = scmp.eq.s32.totalorder %s20, 0
      %p124 = por %p122, %p123
      %p125 = scmp.ne.s32.totalorder %s117, %s119
      %p126 = scmp.eq.s32.totalorder %s25, 1
      %p127 = por %p125, %p126
      %p128 = scmp.ne.s32.totalorder %s119, %s120
      %p129 = scmp.eq.s32.totalorder %s25, 0
      %p130 = por %p128, %p129
      %p131 = scmp.ne.s32.totalorder %s119, %s120
      %p132 = scmp.eq.s32.totalorder %s26, 1
      %p133 = por %p131, %p132
      %p135 = scmp.ne.s32.totalorder %s120, %s134
      %p136 = scmp.eq.s32.totalorder %s26, 0
      %p137 = por %p135, %p136
      %s139 = sadd.s32 %s138, 1
      %p142 = scmp.eq.s32.totalorder %s20, 1
      %p143 = scmp.ne.s32.totalorder %s138, %s140
      %p144 = scmp.eq.s32.totalorder %s20, 0
      %p145 = por %p143, %p144
      %p146 = scmp.ne.s32.totalorder %s138, %s140
      %p147 = scmp.eq.s32.totalorder %s25, 1
      %p148 = por %p146, %p147
      %p149 = scmp.ne.s32.totalorder %s140, %s141
      %p150 = scmp.eq.s32.totalorder %s25, 0
      %p151 = por %p149, %p150
      %p152 = scmp.ne.s32.totalorder %s140, %s141
      %p153 = scmp.eq.s32.totalorder %s26, 1
      %p154 = por %p152, %p153
      %p156 = scmp.ne.s32.totalorder %s141, %s155
      %p157 = scmp.eq.s32.totalorder %s26, 0
      %p158 = por %p156, %p157
      %s160 = sadd.s32 %s159, 1
      %p163 = scmp.eq.s32.totalorder %s20, 1
      %p164 = scmp.ne.s32.totalorder %s159, %s161
      %p165 = scmp.eq.s32.totalorder %s20, 0
      %p166 = por %p164, %p165
      %p167 = scmp.ne.s32.totalorder %s159, %s161
      %p168 = scmp.eq.s32.totalorder %s25, 1
      %p169 = por %p167, %p168
      %p170 = scmp.ne.s32.totalorder %s161, %s162
      %p171 = scmp.eq.s32.totalorder %s25, 0
      %p172 = por %p170, %p171
      %p173 = scmp.ne.s32.totalorder %s161, %s162
      %p174 = scmp.eq.s32.totalorder %s26, 1
      %p175 = por %p173, %p174
      %p177 = scmp.ne.s32.totalorder %s162, %s176
      %p178 = scmp.eq.s32.totalorder %s26, 0
      %p179 = por %p177, %p178
      %s180 = ssub.s32 %s20, %s27
      %p181 = scmp.eq.s32.totalorder %s180, 0
      %s183 = sadd.s32 %s182, 1
      %s184 = scalar_select %p181, %s182, %s183
      %p187 = pneg %p181
      %p188 = scmp.eq.s32.totalorder %s20, 1
      %p189 = por %p187, %p188
      %p190 = scmp.ne.s32.totalorder %s182, %s185
      %p191 = scmp.eq.s32.totalorder %s20, 0
      %p192 = por %p190, %p191
      %p193 = scmp.ne.s32.totalorder %s182, %s185
      %p194 = scmp.eq.s32.totalorder %s25, 1
      %p195 = por %p193, %p194
      %p196 = scmp.ne.s32.totalorder %s185, %s186
      %p197 = scmp.eq.s32.totalorder %s25, 0
      %p198 = por %p196, %p197
      %p199 = scmp.ne.s32.totalorder %s185, %s186
      %p200 = scmp.eq.s32.totalorder %s26, 1
      %p201 = por %p199, %p200
      %p203 = scmp.ne.s32.totalorder %s186, %s202
      %p204 = scmp.eq.s32.totalorder %s26, 0
      %p205 = por %p203, %p204
      %p206 = scmp.le.s32.totalorder 1, %s20
      %p207 = scmp.lt.s32.totalorder %s20, 3
      %p208 = pnand %p206, %p207
      %p209 = pneg %p208
      // Predicated region
      $region9: #{tpu_custom_call.1} parent=5 // pred_check
        _
      $region10: #{tpu_custom_call.1} parent=5 // pred_check_branch
        %211 = sbr.rel (%p208) target = $region12
      $region11: #{tpu_custom_call.1} parent=5 // pred_region
        %s212 = ssub.s32 %s20, 1
        // Predicated region
        $region13: #{tpu_custom_call.1} parent=11 // pred_check
          %p213 = pneg %p67
        $region14: #{tpu_custom_call.1} parent=11 // pred_check_branch
          %215 = sbr.rel (%p213) target = $region16
        $region15: #{tpu_custom_call.1} parent=11 // pred_region
          %217 = vsyncadd [#allocation6], 0
          %s218 = sshll.u32 %s1, 4
          %s219 = int_to_ptr.hbm [resolvable:$true] %s218
          %s220 = sshll.u32 [#allocation5], 4
          %s221 = int_to_ptr.vmem [resolvable:$true] %s220
          %226 = dma.hbm_to_vmem [thread:$0]  %s219, 3072, %s221, [#allocation6], 64, 64, 4
        $region16: #{tpu_custom_call.1} parent=11 // pred_fallthru
          _
        // Predicated region
        $region17: #{tpu_custom_call.1} parent=11 // pred_check
          %p227 = pneg %p88
        $region18: #{tpu_custom_call.1} parent=11 // pred_check_branch
          %229 = sbr.rel (%p227) target = $region20
        $region19: #{tpu_custom_call.1} parent=11 // pred_region
          _
        $region20: #{tpu_custom_call.1} parent=11 // pred_fallthru
          _
        // Predicated region
        $region21: #{tpu_custom_call.1} parent=11 // pred_check
          %p230 = pneg %p109
        $region22: #{tpu_custom_call.1} parent=11 // pred_check_branch
          %232 = sbr.rel (%p230) target = $region24
        $region23: #{tpu_custom_call.1} parent=11 // pred_region
          _
        $region24: #{tpu_custom_call.1} parent=11 // pred_fallthru
          _
        // Predicated region
        $region25: #{tpu_custom_call.1} parent=11 // pred_check
          %p233 = pneg %p130
        $region26: #{tpu_custom_call.1} parent=11 // pred_check_branch
          %235 = sbr.rel (%p233) target = $region28
        $region27: #{tpu_custom_call.1} parent=11 // pred_region
          %237 = vsyncadd [#allocation6], 0
          %s238 = sshll.u32 %s4, 4
          %s239 = int_to_ptr.hbm [resolvable:$true] %s238
          %s240 = sshll.u32 [#allocation7], 4
          %s241 = int_to_ptr.vmem [resolvable:$true] %s240
          %246 = dma.hbm_to_vmem [thread:$0]  %s239, 3072, %s241, [#allocation6], 64, 64, 4
        $region28: #{tpu_custom_call.1} parent=11 // pred_fallthru
          _
        // Predicated region
        $region29: #{tpu_custom_call.1} parent=11 // pred_check
          %p247 = pneg %p151
        $region30: #{tpu_custom_call.1} parent=11 // pred_check_branch
          %249 = sbr.rel (%p247) target = $region32
        $region31: #{tpu_custom_call.1} parent=11 // pred_region
          _
        $region32: #{tpu_custom_call.1} parent=11 // pred_fallthru
          _
        // Predicated region
        $region33: #{tpu_custom_call.1} parent=11 // pred_check
          %p250 = pneg %p172
        $region34: #{tpu_custom_call.1} parent=11 // pred_check_branch
          %252 = sbr.rel (%p250) target = $region36
        $region35: #{tpu_custom_call.1} parent=11 // pred_region
          _
        $region36: #{tpu_custom_call.1} parent=11 // pred_fallthru
          _
      $region12: #{tpu_custom_call.1} parent=5 // pred_fallthru
        _
      %p253 = scmp.lt.s32.totalorder %s20, 2
      // Predicated region
      $region37: #{tpu_custom_call.1} parent=5 // pred_check
        %p254 = pneg %p253
      $region38: #{tpu_custom_call.1} parent=5 // pred_check_branch
        %256 = sbr.rel (%p254) target = $region40
      $region39: #{tpu_custom_call.1} parent=5 // pred_region
        // Predicated region
        $region41: #{tpu_custom_call.1} parent=39 // pred_check
          %p257 = pneg %p40
        $region42: #{tpu_custom_call.1} parent=39 // pred_check_branch
          %259 = sbr.rel (%p257) target = $region44
        $region43: #{tpu_custom_call.1} parent=39 // pred_region
          %s260 = sand.u32 %s30, 1
          %s261 = scalar_lea.sflag [#allocation3], %s260
          %s262 = sand.u32 %s30, 1
          %s263 = smul.addr %s262, 8
          %s264 = scalar_lea.vmem [#allocation2], %s263
          %266 = vsyncadd %s261, 0
          %s267 = smul.addr %s20, 8
          %s268 = scalar_lea.hbm %s0, %s267
          %s270 = sshll.u32 %s268, 4
          %s271 = int_to_ptr.hbm [resolvable:$true] %s270
          %s272 = sshll.u32 %s264, 4
          %s273 = int_to_ptr.vmem [resolvable:$true] %s272
          %275 = dma.hbm_to_vmem [thread:$0]  %s271, 128, %s273, %s261
        $region44: #{tpu_custom_call.1} parent=39 // pred_fallthru
          _
      $region40: #{tpu_custom_call.1} parent=5 // pred_fallthru
        _
      %p276 = scmp.le.s32.totalorder 1, %s20
      %p277 = scmp.lt.s32.totalorder %s20, 3
      %p278 = pnand %p276, %p277
      %p279 = pneg %p278
      // Predicated region
      $region45: #{tpu_custom_call.1} parent=5 // pred_check
        _
      $region46: #{tpu_custom_call.1} parent=5 // pred_check_branch
        %281 = sbr.rel (%p278) target = $region48
      $region47: #{tpu_custom_call.1} parent=5 // pred_region
        %s282 = ssub.s32 %s20, 1
        %s283 = sand.u32 %s33, 1
        %s284 = scalar_lea.sflag [#allocation3], %s283
        %s285 = sand.u32 %s33, 1
        %s286 = smul.addr %s285, 8
        %s287 = scalar_lea.vmem [#allocation2], %s286
        // Predicated region
        $region49: #{tpu_custom_call.1} parent=47 // pred_check
          %p288 = pneg %p46
        $region50: #{tpu_custom_call.1} parent=47 // pred_check_branch
          %290 = sbr.rel (%p288) target = $region52
        $region51: #{tpu_custom_call.1} parent=47 // pred_region
          %292 = dma.done %s284, 128
        $region52: #{tpu_custom_call.1} parent=47 // pred_fallthru
          _
        // Predicated region
        $region53: #{tpu_custom_call.1} parent=47 // pred_check
          %p293 = pneg %p67
        $region54: #{tpu_custom_call.1} parent=47 // pred_check_branch
          %295 = sbr.rel (%p293) target = $region56
        $region55: #{tpu_custom_call.1} parent=47 // pred_region
          %297 = dma.done [#allocation6], 3072
        $region56: #{tpu_custom_call.1} parent=47 // pred_fallthru
          _
        // Predicated region
        $region57: #{tpu_custom_call.1} parent=47 // pred_check
          %p298 = pneg %p130
        $region58: #{tpu_custom_call.1} parent=47 // pred_check_branch
          %300 = sbr.rel (%p298) target = $region60
        $region59: #{tpu_custom_call.1} parent=47 // pred_region
          %302 = dma.done [#allocation6], 3072
        $region60: #{tpu_custom_call.1} parent=47 // pred_fallthru
          _
        %s303 = sand.u32 %s33, 1
        %s304 = scalar_lea.sflag [#allocation3], %s303
        %s305 = sand.u32 %s33, 1
        %s306 = smul.addr %s305, 8
        %s307 = scalar_lea.vmem [#allocation2], %s306
        %p308 = pneg %p46
        %p309 = pneg %p43
        %p310 = pneg %p67
        %p311 = pneg %p64
        %p312 = pneg %p88
        %p313 = pneg %p85
        %p314 = pneg %p109
        %p315 = pneg %p106
        %p316 = pneg %p130
        %p317 = pneg %p127
        %p318 = pneg %p151
        %p319 = pneg %p148
        %p320 = pneg %p172
        %p321 = pneg %p169
        %p322 = pneg %p198
        %p323 = pneg %p195
        %s324 = sand.u32 %s185, 1
        %s325 = scalar_lea.sflag [#allocation4], %s324
        %s326 = sand.u32 %s185, 1
        %s327 = smul.addr %s326, 8
        %s328 = scalar_lea.vmem [#allocation8], %s327
        %v329 = vld [vmem:[%s287] sm:$0xff]
        %v330 = vlaneseq
        %v331 = vshrl.u32 %v330, 7
        %vm332 = vcmp.eq.s32.totalorder %v331, 0
        %vm333 = vcmp.eq.s32.totalorder %v331, 7
        %v334 = vpack.c.bf16 %v329, %v329
        %v335 = vld [vmem:[#allocation5] sm:$0xf]
        %v336 = vld [vmem:[#allocation5 + $0x4] sm:$0xf]
        %v337 = vld [vmem:[#allocation5 + $0x8] sm:$0xf]
        %v338 = vld [vmem:[#allocation5 + $0xc] sm:$0xf]
        %v339 = vld [vmem:[#allocation5 + $0x10] sm:$0xf]
        %v340 = vld [vmem:[#allocation5 + $0x14] sm:$0xf]
        %v341 = vld [vmem:[#allocation5 + $0x18] sm:$0xf]
        %v342 = vld [vmem:[#allocation5 + $0x1c] sm:$0xf]
        %v343 = vld [vmem:[#allocation5 + $0x20] sm:$0xf]
        %v344 = vld [vmem:[#allocation5 + $0x24] sm:$0xf]
        %v345 = vld [vmem:[#allocation5 + $0x28] sm:$0xf]
        %v346 = vld [vmem:[#allocation5 + $0x2c] sm:$0xf]
        %v347 = vld [vmem:[#allocation5 + $0x30] sm:$0xf]
        %v348 = vld [vmem:[#allocation5 + $0x34] sm:$0xf]
        %v349 = vld [vmem:[#allocation5 + $0x38] sm:$0xf]
        %v350 = vld [vmem:[#allocation5 + $0x3c] sm:$0xf]
        %v367 = vunpack.c.l.b16 %v335
        %v368 = vunpack.c.l.b16 %v336
        %v369 = vunpack.c.l.b16 %v337
        %v370 = vunpack.c.l.b16 %v338
        %v371 = vunpack.c.l.b16 %v339
        %v372 = vunpack.c.l.b16 %v340
        %v373 = vunpack.c.l.b16 %v341
        %v374 = vunpack.c.l.b16 %v342
        %v375 = vunpack.c.l.b16 %v343
        %v376 = vunpack.c.l.b16 %v344
        %v377 = vunpack.c.l.b16 %v345
        %v378 = vunpack.c.l.b16 %v346
        %v379 = vunpack.c.l.b16 %v347
        %v380 = vunpack.c.l.b16 %v348
        %v381 = vunpack.c.l.b16 %v349
        %v382 = vunpack.c.l.b16 %v350
        %v383 = vpack.c.b16 %v368, %v367
        %v384 = vpack.c.b16 %v370, %v369
        %v385 = vpack.c.b16 %v372, %v371
        %v386 = vpack.c.b16 %v374, %v373
        %v387 = vpack.c.b16 %v376, %v375
        %v388 = vpack.c.b16 %v378, %v377
        %v389 = vpack.c.b16 %v380, %v379
        %v390 = vpack.c.b16 %v382, %v381
        %399 = vmatpush.bf16.msra.mxu0 %v390
        %400 = vmatpush.bf16.msra.mxu0 %v389
        %401 = vmatpush.bf16.msra.mxu0 %v388
        %402 = vmatpush.bf16.msra.mxu0 %v387
        %403 = vmatpush.bf16.msra.mxu0 %v386
        %404 = vmatpush.bf16.msra.mxu0 %v385
        %405 = vmatpush.bf16.msra.mxu0 %v384
        %406 = vmatpush.bf16.msra.mxu0 %v383
        %407 = vmatmul.bf16.gmra.mxu0 %v334
        %v408 = vpop.f32.mrf.mxu0
        %v409 = vadd.f32 0.0, %v408
        %v410 = vpop.f32.mrf.mxu0
        %411 = vdwg.mxu0
        %s412 = scalar_lea.vmem [#allocation5], 64
        %v413 = vld [vmem:[%s412] sm:$0xf]
        %v414 = vld [vmem:[%s412 + $0x4] sm:$0xf]
        %v415 = vld [vmem:[%s412 + $0x8] sm:$0xf]
        %v416 = vld [vmem:[%s412 + $0xc] sm:$0xf]
        %v417 = vld [vmem:[%s412 + $0x10] sm:$0xf]
        %v418 = vld [vmem:[%s412 + $0x14] sm:$0xf]
        %v419 = vld [vmem:[%s412 + $0x18] sm:$0xf]
        %v420 = vld [vmem:[%s412 + $0x1c] sm:$0xf]
        %v421 = vld [vmem:[%s412 + $0x20] sm:$0xf]
        %v422 = vld [vmem:[%s412 + $0x24] sm:$0xf]
        %v423 = vld [vmem:[%s412 + $0x28] sm:$0xf]
        %v424 = vld [vmem:[%s412 + $0x2c] sm:$0xf]
        %v425 = vld [vmem:[%s412 + $0x30] sm:$0xf]
        %v426 = vld [vmem:[%s412 + $0x34] sm:$0xf]
        %v427 = vld [vmem:[%s412 + $0x38] sm:$0xf]
        %v428 = vld [vmem:[%s412 + $0x3c] sm:$0xf]
        %s429 = scalar_lea.vmem [#allocation5], 128
        %v430 = vld [vmem:[%s429] sm:$0xf]
        %v431 = vld [vmem:[%s429 + $0x4] sm:$0xf]
        %v432 = vld [vmem:[%s429 + $0x8] sm:$0xf]
        %v433 = vld [vmem:[%s429 + $0xc] sm:$0xf]
        %v434 = vld [vmem:[%s429 + $0x10] sm:$0xf]
        %v435 = vld [vmem:[%s429 + $0x14] sm:$0xf]
        %v436 = vld [vmem:[%s429 + $0x18] sm:$0xf]
        %v437 = vld [vmem:[%s429 + $0x1c] sm:$0xf]
        %v438 = vld [vmem:[%s429 + $0x20] sm:$0xf]
        %v439 = vld [vmem:[%s429 + $0x24] sm:$0xf]
        %v440 = vld [vmem:[%s429 + $0x28] sm:$0xf]
        %v441 = vld [vmem:[%s429 + $0x2c] sm:$0xf]
        %v442 = vld [vmem:[%s429 + $0x30] sm:$0xf]
        %v443 = vld [vmem:[%s429 + $0x34] sm:$0xf]
        %v444 = vld [vmem:[%s429 + $0x38] sm:$0xf]
        %v445 = vld [vmem:[%s429 + $0x3c] sm:$0xf]
        %v462 = vunpack.c.l.b16 %v430
        %v463 = vunpack.c.l.b16 %v431
        %v464 = vunpack.c.l.b16 %v432
        %v465 = vunpack.c.l.b16 %v433
        %v466 = vunpack.c.l.b16 %v434
        %v467 = vunpack.c.l.b16 %v435
        %v468 = vunpack.c.l.b16 %v436
        %v469 = vunpack.c.l.b16 %v437
        %v470 = vunpack.c.l.b16 %v438
        %v471 = vunpack.c.l.b16 %v439
        %v472 = vunpack.c.l.b16 %v440
        %v473 = vunpack.c.l.b16 %v441
        %v474 = vunpack.c.l.b16 %v442
        %v475 = vunpack.c.l.b16 %v443
        %v476 = vunpack.c.l.b16 %v444
        %v477 = vunpack.c.l.b16 %v445
        %v478 = vpack.c.b16 %v463, %v462
        %v479 = vpack.c.b16 %v465, %v464
        %v480 = vpack.c.b16 %v467, %v466
        %v481 = vpack.c.b16 %v469, %v468
        %v482 = vpack.c.b16 %v471, %v470
        %v483 = vpack.c.b16 %v473, %v472
        %v484 = vpack.c.b16 %v475, %v474
        %v485 = vpack.c.b16 %v477, %v476
        %494 = vmatpush.bf16.msra.mxu0 %v485
        %495 = vmatpush.bf16.msra.mxu0 %v484
        %496 = vmatpush.bf16.msra.mxu0 %v483
        %497 = vmatpush.bf16.msra.mxu0 %v482
        %498 = vmatpush.bf16.msra.mxu0 %v481
        %499 = vmatpush.bf16.msra.mxu0 %v480
        %500 = vmatpush.bf16.msra.mxu0 %v479
        %501 = vmatpush.bf16.msra.mxu0 %v478
        %502 = vmatmul.bf16.gmra.mxu0 %v334
        %v503 = vpop.f32.mrf.mxu0
        %v504 = vadd.f32 0.0, %v503
        %v505 = vpop.f32.mrf.mxu0
        %506 = vdwg.mxu0
        %v507 = vrot.slane %v409, 7
        %v508 = vsel %vm332, 0.0, %v507
        %v525 = vunpack.c.l.b16 %v413
        %v526 = vunpack.c.l.b16 %v414
        %v527 = vunpack.c.l.b16 %v415
        %v528 = vunpack.c.l.b16 %v416
        %v529 = vunpack.c.l.b16 %v417
        %v530 = vunpack.c.l.b16 %v418
        %v531 = vunpack.c.l.b16 %v419
        %v532 = vunpack.c.l.b16 %v420
        %v533 = vunpack.c.l.b16 %v421
        %v534 = vunpack.c.l.b16 %v422
        %v535 = vunpack.c.l.b16 %v423
        %v536 = vunpack.c.l.b16 %v424
        %v537 = vunpack.c.l.b16 %v425
        %v538 = vunpack.c.l.b16 %v426
        %v539 = vunpack.c.l.b16 %v427
        %v540 = vunpack.c.l.b16 %v428
        %v541 = vpack.c.b16 %v526, %v525
        %v542 = vpack.c.b16 %v528, %v527
        %v543 = vpack.c.b16 %v530, %v529
        %v544 = vpack.c.b16 %v532, %v531
        %v545 = vpack.c.b16 %v534, %v533
        %v546 = vpack.c.b16 %v536, %v535
        %v547 = vpack.c.b16 %v538, %v537
        %v548 = vpack.c.b16 %v540, %v539
        %557 = vmatpush.bf16.msra.mxu0 %v548
        %558 = vmatpush.bf16.msra.mxu0 %v547
        %559 = vmatpush.bf16.msra.mxu0 %v546
        %560 = vmatpush.bf16.msra.mxu0 %v545
        %561 = vmatpush.bf16.msra.mxu0 %v544
        %562 = vmatpush.bf16.msra.mxu0 %v543
        %563 = vmatpush.bf16.msra.mxu0 %v542
        %564 = vmatpush.bf16.msra.mxu0 %v541
        %565 = vmatmul.bf16.gmra.mxu0 %v334
        %v566 = vpop.f32.mrf.mxu0
        %v567 = vadd.f32 %v508, %v566
        %v568 = vpop.f32.mrf.mxu0
        %569 = vdwg.mxu0
        %v570 = vrot.slane %v504, 1
        %v571 = vsel %vm333, 0.0, %v570
        %v572 = vadd.f32 %v567, %v571
        %v573 = vld [vmem:[%s2] sm:$0x1]
        %v575 = vperm.slane %v573, 0
        %v577 = vmul.f32 %v572, %v575
        %v578 = vld [vmem:[%s3] sm:$0x1]
        %v580 = vperm.slane %v578, 0
        %v582 = vadd.f32 %v577, %v580
        %v583 = vmax.f32 %v582, 0.0
        %v584 = vpack.c.bf16 %v583, %v583
        %v585 = vld [vmem:[#allocation7] sm:$0xf]
        %v586 = vld [vmem:[#allocation7 + $0x4] sm:$0xf]
        %v587 = vld [vmem:[#allocation7 + $0x8] sm:$0xf]
        %v588 = vld [vmem:[#allocation7 + $0xc] sm:$0xf]
        %v589 = vld [vmem:[#allocation7 + $0x10] sm:$0xf]
        %v590 = vld [vmem:[#allocation7 + $0x14] sm:$0xf]
        %v591 = vld [vmem:[#allocation7 + $0x18] sm:$0xf]
        %v592 = vld [vmem:[#allocation7 + $0x1c] sm:$0xf]
        %v593 = vld [vmem:[#allocation7 + $0x20] sm:$0xf]
        %v594 = vld [vmem:[#allocation7 + $0x24] sm:$0xf]
        %v595 = vld [vmem:[#allocation7 + $0x28] sm:$0xf]
        %v596 = vld [vmem:[#allocation7 + $0x2c] sm:$0xf]
        %v597 = vld [vmem:[#allocation7 + $0x30] sm:$0xf]
        %v598 = vld [vmem:[#allocation7 + $0x34] sm:$0xf]
        %v599 = vld [vmem:[#allocation7 + $0x38] sm:$0xf]
        %v600 = vld [vmem:[#allocation7 + $0x3c] sm:$0xf]
        %v617 = vunpack.c.l.b16 %v585
        %v618 = vunpack.c.l.b16 %v586
        %v619 = vunpack.c.l.b16 %v587
        %v620 = vunpack.c.l.b16 %v588
        %v621 = vunpack.c.l.b16 %v589
        %v622 = vunpack.c.l.b16 %v590
        %v623 = vunpack.c.l.b16 %v591
        %v624 = vunpack.c.l.b16 %v592
        %v625 = vunpack.c.l.b16 %v593
        %v626 = vunpack.c.l.b16 %v594
        %v627 = vunpack.c.l.b16 %v595
        %v628 = vunpack.c.l.b16 %v596
        %v629 = vunpack.c.l.b16 %v597
        %v630 = vunpack.c.l.b16 %v598
        %v631 = vunpack.c.l.b16 %v599
        %v632 = vunpack.c.l.b16 %v600
        %v633 = vpack.c.b16 %v618, %v617
        %v634 = vpack.c.b16 %v620, %v619
        %v635 = vpack.c.b16 %v622, %v621
        %v636 = vpack.c.b16 %v624, %v623
        %v637 = vpack.c.b16 %v626, %v625
        %v638 = vpack.c.b16 %v628, %v627
        %v639 = vpack.c.b16 %v630, %v629
        %v640 = vpack.c.b16 %v632, %v631
        %649 = vmatpush.bf16.msra.mxu0 %v640
        %650 = vmatpush.bf16.msra.mxu0 %v639
        %651 = vmatpush.bf16.msra.mxu0 %v638
        %652 = vmatpush.bf16.msra.mxu0 %v637
        %653 = vmatpush.bf16.msra.mxu0 %v636
        %654 = vmatpush.bf16.msra.mxu0 %v635
        %655 = vmatpush.bf16.msra.mxu0 %v634
        %656 = vmatpush.bf16.msra.mxu0 %v633
        %657 = vmatmul.bf16.gmra.mxu0 %v584
        %v658 = vpop.f32.mrf.mxu0
        %v659 = vadd.f32 0.0, %v658
        %v660 = vpop.f32.mrf.mxu0
        %661 = vdwg.mxu0
        %s662 = scalar_lea.vmem [#allocation7], 64
        %v663 = vld [vmem:[%s662] sm:$0xf]
        %v664 = vld [vmem:[%s662 + $0x4] sm:$0xf]
        %v665 = vld [vmem:[%s662 + $0x8] sm:$0xf]
        %v666 = vld [vmem:[%s662 + $0xc] sm:$0xf]
        %v667 = vld [vmem:[%s662 + $0x10] sm:$0xf]
        %v668 = vld [vmem:[%s662 + $0x14] sm:$0xf]
        %v669 = vld [vmem:[%s662 + $0x18] sm:$0xf]
        %v670 = vld [vmem:[%s662 + $0x1c] sm:$0xf]
        %v671 = vld [vmem:[%s662 + $0x20] sm:$0xf]
        %v672 = vld [vmem:[%s662 + $0x24] sm:$0xf]
        %v673 = vld [vmem:[%s662 + $0x28] sm:$0xf]
        %v674 = vld [vmem:[%s662 + $0x2c] sm:$0xf]
        %v675 = vld [vmem:[%s662 + $0x30] sm:$0xf]
        %v676 = vld [vmem:[%s662 + $0x34] sm:$0xf]
        %v677 = vld [vmem:[%s662 + $0x38] sm:$0xf]
        %v678 = vld [vmem:[%s662 + $0x3c] sm:$0xf]
        %s679 = scalar_lea.vmem [#allocation7], 128
        %v680 = vld [vmem:[%s679] sm:$0xf]
        %v681 = vld [vmem:[%s679 + $0x4] sm:$0xf]
        %v682 = vld [vmem:[%s679 + $0x8] sm:$0xf]
        %v683 = vld [vmem:[%s679 + $0xc] sm:$0xf]
        %v684 = vld [vmem:[%s679 + $0x10] sm:$0xf]
        %v685 = vld [vmem:[%s679 + $0x14] sm:$0xf]
        %v686 = vld [vmem:[%s679 + $0x18] sm:$0xf]
        %v687 = vld [vmem:[%s679 + $0x1c] sm:$0xf]
        %v688 = vld [vmem:[%s679 + $0x20] sm:$0xf]
        %v689 = vld [vmem:[%s679 + $0x24] sm:$0xf]
        %v690 = vld [vmem:[%s679 + $0x28] sm:$0xf]
        %v691 = vld [vmem:[%s679 + $0x2c] sm:$0xf]
        %v692 = vld [vmem:[%s679 + $0x30] sm:$0xf]
        %v693 = vld [vmem:[%s679 + $0x34] sm:$0xf]
        %v694 = vld [vmem:[%s679 + $0x38] sm:$0xf]
        %v695 = vld [vmem:[%s679 + $0x3c] sm:$0xf]
        %v712 = vunpack.c.l.b16 %v680
        %v713 = vunpack.c.l.b16 %v681
        %v714 = vunpack.c.l.b16 %v682
        %v715 = vunpack.c.l.b16 %v683
        %v716 = vunpack.c.l.b16 %v684
        %v717 = vunpack.c.l.b16 %v685
        %v718 = vunpack.c.l.b16 %v686
        %v719 = vunpack.c.l.b16 %v687
        %v720 = vunpack.c.l.b16 %v688
        %v721 = vunpack.c.l.b16 %v689
        %v722 = vunpack.c.l.b16 %v690
        %v723 = vunpack.c.l.b16 %v691
        %v724 = vunpack.c.l.b16 %v692
        %v725 = vunpack.c.l.b16 %v693
        %v726 = vunpack.c.l.b16 %v694
        %v727 = vunpack.c.l.b16 %v695
        %v728 = vpack.c.b16 %v713, %v712
        %v729 = vpack.c.b16 %v715, %v714
        %v730 = vpack.c.b16 %v717, %v716
        %v731 = vpack.c.b16 %v719, %v718
        %v732 = vpack.c.b16 %v721, %v720
        %v733 = vpack.c.b16 %v723, %v722
        %v734 = vpack.c.b16 %v725, %v724
        %v735 = vpack.c.b16 %v727, %v726
        %744 = vmatpush.bf16.msra.mxu0 %v735
        %745 = vmatpush.bf16.msra.mxu0 %v734
        %746 = vmatpush.bf16.msra.mxu0 %v733
        %747 = vmatpush.bf16.msra.mxu0 %v732
        %748 = vmatpush.bf16.msra.mxu0 %v731
        %749 = vmatpush.bf16.msra.mxu0 %v730
        %750 = vmatpush.bf16.msra.mxu0 %v729
        %751 = vmatpush.bf16.msra.mxu0 %v728
        %752 = vmatmul.bf16.gmra.mxu0 %v584
        %v753 = vpop.f32.mrf.mxu0
        %v754 = vadd.f32 0.0, %v753
        %v755 = vpop.f32.mrf.mxu0
        %756 = vdwg.mxu0
        %v757 = vrot.slane %v659, 7
        %v758 = vsel %vm332, 0.0, %v757
        %v775 = vunpack.c.l.b16 %v663
        %v776 = vunpack.c.l.b16 %v664
        %v777 = vunpack.c.l.b16 %v665
        %v778 = vunpack.c.l.b16 %v666
        %v779 = vunpack.c.l.b16 %v667
        %v780 = vunpack.c.l.b16 %v668
        %v781 = vunpack.c.l.b16 %v669
        %v782 = vunpack.c.l.b16 %v670
        %v783 = vunpack.c.l.b16 %v671
        %v784 = vunpack.c.l.b16 %v672
        %v785 = vunpack.c.l.b16 %v673
        %v786 = vunpack.c.l.b16 %v674
        %v787 = vunpack.c.l.b16 %v675
        %v788 = vunpack.c.l.b16 %v676
        %v789 = vunpack.c.l.b16 %v677
        %v790 = vunpack.c.l.b16 %v678
        %v791 = vpack.c.b16 %v776, %v775
        %v792 = vpack.c.b16 %v778, %v777
        %v793 = vpack.c.b16 %v780, %v779
        %v794 = vpack.c.b16 %v782, %v781
        %v795 = vpack.c.b16 %v784, %v783
        %v796 = vpack.c.b16 %v786, %v785
        %v797 = vpack.c.b16 %v788, %v787
        %v798 = vpack.c.b16 %v790, %v789
        %807 = vmatpush.bf16.msra.mxu0 %v798
        %808 = vmatpush.bf16.msra.mxu0 %v797
        %809 = vmatpush.bf16.msra.mxu0 %v796
        %810 = vmatpush.bf16.msra.mxu0 %v795
        %811 = vmatpush.bf16.msra.mxu0 %v794
        %812 = vmatpush.bf16.msra.mxu0 %v793
        %813 = vmatpush.bf16.msra.mxu0 %v792
        %814 = vmatpush.bf16.msra.mxu0 %v791
        %815 = vmatmul.bf16.gmra.mxu0 %v584
        %v816 = vpop.f32.mrf.mxu0
        %v817 = vadd.f32 %v758, %v816
        %v818 = vpop.f32.mrf.mxu0
        %819 = vdwg.mxu0
        %v820 = vrot.slane %v754, 1
        %v821 = vsel %vm333, 0.0, %v820
        %v822 = vadd.f32 %v817, %v821
        %v823 = vld [vmem:[%s5] sm:$0x1]
        %v825 = vperm.slane %v823, 0
        %v827 = vmul.f32 %v822, %v825
        %v828 = vld [vmem:[%s6] sm:$0x1]
        %v830 = vperm.slane %v828, 0
        %v832 = vadd.f32 %v827, %v830
        %v833 = vadd.f32 %v832, %v329
        %v834 = vmax.f32 %v833, 0.0
        %835 = vst [vmem:[%s328] sm:$0xff] %v834
        %s836 = sand.u32 %s185, 1
        %s837 = scalar_lea.sflag [#allocation4], %s836
        %s838 = sand.u32 %s185, 1
        %s839 = smul.addr %s838, 8
        %s840 = scalar_lea.vmem [#allocation8], %s839
        // Predicated region
        $region61: #{tpu_custom_call.1} parent=47 // pred_check
          %p841 = pneg %p195
        $region62: #{tpu_custom_call.1} parent=47 // pred_check_branch
          %843 = sbr.rel (%p841) target = $region64
        $region63: #{tpu_custom_call.1} parent=47 // pred_region
          %845 = vsyncadd %s837, 0
          %s846 = smul.addr %s25, 8
          %s847 = scalar_lea.hbm %s7, %s846
          %s849 = sshll.u32 %s840, 4
          %s850 = int_to_ptr.vmem [resolvable:$true] %s849
          %s851 = sshll.u32 %s847, 4
          %s852 = int_to_ptr.hbm [resolvable:$true] %s851
          %854 = dma.vmem_to_hbm [thread:$0]  %s850, 128, %s852, %s837
        $region64: #{tpu_custom_call.1} parent=47 // pred_fallthru
          _
      $region48: #{tpu_custom_call.1} parent=5 // pred_fallthru
        _
      %p855 = scmp.le.s32.totalorder 2, %s20
      // Predicated region
      $region65: #{tpu_custom_call.1} parent=5 // pred_check
        %p856 = pneg %p855
      $region66: #{tpu_custom_call.1} parent=5 // pred_check_branch
        %858 = sbr.rel (%p856) target = $region68
      $region67: #{tpu_custom_call.1} parent=5 // pred_region
        %s859 = ssub.s32 %s20, 2
        // Predicated region
        $region69: #{tpu_custom_call.1} parent=67 // pred_check
          %p860 = pneg %p201
        $region70: #{tpu_custom_call.1} parent=67 // pred_check_branch
          %862 = sbr.rel (%p860) target = $region72
        $region71: #{tpu_custom_call.1} parent=67 // pred_region
          %s863 = sand.u32 %s186, 1
          %s864 = scalar_lea.sflag [#allocation4], %s863
          %s865 = sand.u32 %s186, 1
          %s866 = smul.addr %s865, 8
          %s867 = scalar_lea.vmem [#allocation8], %s866
          %869 = dma.done %s864, 128
        $region72: #{tpu_custom_call.1} parent=67 // pred_fallthru
          _
      $region68: #{tpu_custom_call.1} parent=5 // pred_fallthru
        _
    $region6: #{tpu_custom_call.1} parent=1 // loop_footer
      %s24 = sadd.s32 1, %s20
    $region7: #{tpu_custom_call.1} parent=1 // loop_footer_branch
      %19 = sbr.rel target = $region3
    $region8: #{tpu_custom_call.1} parent=1 // loop_exit
      _
    %870 = vsyncpa [#allocation3], 1
    %s871 = scalar_lea.sflag [#allocation3], 1
    %872 = vsyncpa %s871, 1
    %873 = vsyncpa [#allocation6], 1
    %874 = vsyncpa [#allocation4], 1
    %s875 = scalar_lea.sflag [#allocation4], 1
    %876 = vsyncpa %s875, 1

</llo_original>
